<compile_context>
chip_gen: v6e
topology: v6e:2x2x1
jax: 0.10.0
libtpu: 0.0.40
codegen_flags: <defaults>
</compile_context>

<pallas_src>
import functools

import jax
import jax.numpy as jnp
from jax.experimental import pallas as pl
from jax.experimental.pallas import tpu as pltpu


def mlp_prod_kernel(left_ref, right_ref, w1_ref, b1_ref, w2_ref, b2_ref, o_ref,
                    *, precision):
    # Hadamard product of the two embedding halves (pure VPU, lane-aligned tiles).
    prod = left_ref[...] * right_ref[...]
    # Linear(E, H) + bias + ReLU  (MXU matmul, f32 accumulation).
    h = jnp.dot(prod, w1_ref[...], preferred_element_type=jnp.float32,
                precision=precision)
    h = jnp.maximum(h + b1_ref[...], 0.0)
    # Linear(H, 1): N=1 matmul would waste the MXU -> VPU multiply + lane reduce.
    col = jnp.sum(h * w2_ref[...], axis=-1, keepdims=True) + b2_ref[...]
    o_ref[...] = col.astype(o_ref.dtype)


def _choose_block_b(B, E, itemsize, vmem_budget_bytes):
    """Batch tile: multiple of 128 (MXU M dim / sublane-friendly), sized so two
    double-buffered (block_b, E) input tiles stay under the VMEM budget."""
    if B <= 256:
        return B                      # small problem: single (or few) blocks
    per_row = 4 * E * itemsize        # left+right, each double-buffered
    bb = vmem_budget_bytes // max(per_row, 1)
    bb = min(bb, 2048, B)
    if bb < 128:
        bb = 128                      # floor; scoped VMEM limit gives headroom
    return (bb // 128) * 128


def mlp_prod_decoder(x, w1, b1, w2, b2, *, block_b=None,
                     vmem_budget_bytes=8 << 20, precision=None):
    """x: (B, 2E); w1: (E, H); b1: (1, H); w2: (H, 1); b2: (1, 1) -> (B, 1).

    precision: optional jax.lax.Precision for the first matmul. Default (None)
    uses the Mosaic f32 default, which matches the f32 reference to <1e-4 at
    these scales; pass Precision.HIGHEST explicitly for very large E.
    """
    B, two_e = x.shape
    E, H = w1.shape
    assert two_e == 2 * E
    out_dtype = x.dtype
    itemsize = jnp.dtype(x.dtype).itemsize

    if block_b is None:
        block_b = _choose_block_b(B, E, itemsize, vmem_budget_bytes)
    block_b = max(1, min(block_b, B))
    grid = (pl.cdiv(B, block_b),)

    # Canonical parameter layouts for the kernel.
    w1 = w1.reshape(E, H)
    b1_row = b1.reshape(1, H)
    w2_row = w2.reshape(1, H)
    b2_s = b2.reshape(1, 1)

    if E % 128 == 0:
        # Zero-copy: pass x twice; BlockSpecs pick lane-aligned left/right tiles.
        left_in, right_in = x, x
        left_spec = pl.BlockSpec((block_b, E), lambda i: (i, 0))
        right_spec = pl.BlockSpec((block_b, E), lambda i: (i, 1))
    else:
        # Fallback for lane-unaligned E: split once in the wrapper so the kernel
        # still sees two aligned (block_b, E) tiles (keeps the XLU slot free).
        left_in, right_in = x[:, :E], x[:, E:]
        left_spec = pl.BlockSpec((block_b, E), lambda i: (i, 0))
        right_spec = pl.BlockSpec((block_b, E), lambda i: (i, 0))

    # Explicit scoped-VMEM limit: footprint of double-buffered input tiles +
    # resident weights, with headroom; capped below v7x's 64 MiB physical VMEM.
    x_buf_bytes = 2 * 2 * block_b * E * itemsize
    w_bytes = (w1.size * jnp.dtype(w1.dtype).itemsize
               + (b1_row.size + w2_row.size + b2_s.size) * 4)
    out_buf_bytes = 2 * block_b * jnp.dtype(out_dtype).itemsize
    vmem_limit = int(min(max(2 * (x_buf_bytes + w_bytes + out_buf_bytes), 16 << 20),
                         48 << 20))

    flops = 2 * B * E * H + 2 * B * H + B * E
    bytes_accessed = (x.size * itemsize
                      + w1.size * jnp.dtype(w1.dtype).itemsize
                      + (b1_row.size + w2_row.size + b2_s.size) * 4
                      + B * jnp.dtype(out_dtype).itemsize)

    kernel = functools.partial(mlp_prod_kernel, precision=precision)

    return pl.pallas_call(
        kernel,
        out_shape=jax.ShapeDtypeStruct((B, 1), out_dtype),
        grid_spec=pltpu.PrefetchScalarGridSpec(
            num_scalar_prefetch=0,
            grid=grid,
            in_specs=[
                left_spec,                                   # left embedding tile
                right_spec,                                  # right embedding tile
                pl.BlockSpec((E, H), lambda i: (0, 0)),      # w1 (VMEM-resident)
                pl.BlockSpec((1, H), lambda i: (0, 0)),      # b1
                pl.BlockSpec((1, H), lambda i: (0, 0)),      # w2 as a row
                pl.BlockSpec((1, 1), lambda i: (0, 0)),      # b2
            ],
            out_specs=pl.BlockSpec((block_b, 1), lambda i: (i, 0)),
        ),
        compiler_params=pltpu.CompilerParams(
            dimension_semantics=("parallel",),
            vmem_limit_bytes=vmem_limit,
        ),
        cost_estimate=pl.CostEstimate(
            flops=flops, transcendentals=0, bytes_accessed=bytes_accessed),
    )(left_in, right_in, w1, b1_row, w2_row, b2_s)


def reference(x, w1, b1, w2, b2):
    E = w1.shape[0]
    prod = x[:, :E] * x[:, E:]
    h = jnp.maximum(prod @ w1 + b1, 0.0)
    return h @ w2 + b2


if __name__ == "__main__":
    B, E, H = 8, 32, 32  # batch, embedding_size, hidden_size

    key = jax.random.PRNGKey(0)
    kx, kw1, kb1, kw2, kb2 = jax.random.split(key, 5)

    x = jax.random.normal(kx, (B, 2 * E), dtype=jnp.float32)
    # Deterministic synthetic parameters (shapes per nn.Linear in __init__).
    w1 = jax.random.normal(kw1, (E, H), dtype=jnp.float32) * 0.1
    b1 = jax.random.normal(kb1, (1, H), dtype=jnp.float32) * 0.1
    w2 = jax.random.normal(kw2, (H, 1), dtype=jnp.float32) * 0.1
    b2 = jax.random.normal(kb2, (1, 1), dtype=jnp.float32) * 0.1

    # f32 path.
    out = jax.block_until_ready(mlp_prod_decoder(x, w1, b1, w2, b2))
    ref = reference(x, w1, b1, w2, b2)
    assert out.shape == (B, 1), out.shape
    assert jnp.allclose(out, ref, atol=1e-4, rtol=1e-4), "f32 mismatch vs reference"

    # bf16 input path (halves HBM bytes moved for this bandwidth-bound kernel).
    xb, w1b, b1b, w2b, b2b = (a.astype(jnp.bfloat16) for a in (x, w1, b1, w2, b2))
    out_bf16 = jax.block_until_ready(mlp_prod_decoder(xb, w1b, b1b, w2b, b2b))
    ref_bf16 = reference(*(a.astype(jnp.float32) for a in (xb, w1b, b1b, w2b, b2b)))
    assert out_bf16.shape == (B, 1), out_bf16.shape
    assert jnp.allclose(out_bf16.astype(jnp.float32), ref_bf16, atol=1e-1, rtol=1e-1), \
        "bf16 mismatch vs reference"

    print("KERNEL_OK")
</pallas_src>

<mosaic_0001>
module attributes {stable_mosaic.version = 11 : i64} {
  func.func @mlp_prod_kernel(%arg0: i32, %arg1: memref<8x32xf32, #tpu.memory_space<vmem>>, %arg2: memref<8x32xf32, #tpu.memory_space<vmem>>, %arg3: memref<32x32xf32, #tpu.memory_space<vmem>>, %arg4: memref<1x32xf32, #tpu.memory_space<vmem>>, %arg5: memref<1x32xf32, #tpu.memory_space<vmem>>, %arg6: memref<1x1xf32, #tpu.memory_space<vmem>>, %arg7: memref<8x1xf32, #tpu.memory_space<vmem>>) attributes {dimension_semantics = [#tpu.dimension_semantics<parallel>], iteration_bounds = array<i64: 1>, scalar_prefetch = 0 : i64, scratch_operands = 0 : i64, tpu.core_type = #tpu.core_type<tc>, window_params = [{transform_indices = @transform_0, window_bounds = array<i64: 8, 32>}, {transform_indices = @transform_1, window_bounds = array<i64: 8, 32>}, {pipeline_mode = #tpu.pipeline_mode<synchronous>, transform_indices = @transform_2, window_bounds = array<i64: 32, 32>}, {pipeline_mode = #tpu.pipeline_mode<synchronous>, transform_indices = @transform_3, window_bounds = array<i64: 1, 32>}, {pipeline_mode = #tpu.pipeline_mode<synchronous>, transform_indices = @transform_4, window_bounds = array<i64: 1, 32>}, {pipeline_mode = #tpu.pipeline_mode<synchronous>, transform_indices = @transform_5, window_bounds = array<i64: 1, 1>}, {transform_indices = @transform_6, window_bounds = array<i64: 8, 1>}]} {
    %c0 = arith.constant 0 : index
    %c0_0 = arith.constant 0 : index
    %0 = vector.load %arg1[%c0, %c0_0] : memref<8x32xf32, #tpu.memory_space<vmem>>, vector<8x32xf32>
    %c0_1 = arith.constant 0 : index
    %c0_2 = arith.constant 0 : index
    %1 = vector.load %arg2[%c0_1, %c0_2] : memref<8x32xf32, #tpu.memory_space<vmem>>, vector<8x32xf32>
    %2 = arith.mulf %0, %1 : vector<8x32xf32>
    %c0_3 = arith.constant 0 : index
    %c0_4 = arith.constant 0 : index
    %3 = vector.load %arg3[%c0_3, %c0_4] : memref<32x32xf32, #tpu.memory_space<vmem>>, vector<32x32xf32>
    %cst = arith.constant dense<0.000000e+00> : vector<8x32xf32>
    %4 = tpu.matmul %2, %3, %cst {dimension_numbers = #tpu.dot_dimension_numbers<[1], [0], [0], [1], [0, 0, 1, 1], [], []>} : vector<8x32xf32>, vector<32x32xf32>, vector<8x32xf32> -> vector<8x32xf32>
    %c0_5 = arith.constant 0 : index
    %c0_6 = arith.constant 0 : index
    %5 = vector.load %arg4[%c0_5, %c0_6] : memref<1x32xf32, #tpu.memory_space<vmem>>, vector<1x32xf32>
    %6 = vector.broadcast %5 : vector<1x32xf32> to vector<8x32xf32>
    %7 = arith.addf %4, %6 : vector<8x32xf32>
    %cst_7 = arith.constant 0.000000e+00 : f32
    %8 = vector.broadcast %cst_7 : f32 to vector<8x32xf32>
    %9 = arith.maximumf %7, %8 : vector<8x32xf32>
    %c0_8 = arith.constant 0 : index
    %c0_9 = arith.constant 0 : index
    %10 = vector.load %arg5[%c0_8, %c0_9] : memref<1x32xf32, #tpu.memory_space<vmem>>, vector<1x32xf32>
    %11 = vector.broadcast %10 : vector<1x32xf32> to vector<8x32xf32>
    %12 = arith.mulf %9, %11 : vector<8x32xf32>
    %cst_10 = arith.constant dense<0.000000e+00> : vector<8xf32>
    %13 = vector.multi_reduction <add>, %12, %cst_10 [1] : vector<8x32xf32> to vector<8xf32>
    %14 = vector.shape_cast %13 : vector<8xf32> to vector<8x1xf32>
    %c0_11 = arith.constant 0 : index
    %c0_12 = arith.constant 0 : index
    %15 = vector.load %arg6[%c0_11, %c0_12] : memref<1x1xf32, #tpu.memory_space<vmem>>, vector<1x1xf32>
    %16 = vector.broadcast %15 : vector<1x1xf32> to vector<8x1xf32>
    %17 = arith.addf %14, %16 : vector<8x1xf32>
    %c0_13 = arith.constant 0 : index
    %c0_14 = arith.constant 0 : index
    %18 = vector.load %arg7[%c0_13, %c0_14] : memref<8x1xf32, #tpu.memory_space<vmem>>, vector<8x1xf32>
    tpu.vector_store %arg7[%c0_13, %c0_14], %17 {strides = array<i32>} : memref<8x1xf32, #tpu.memory_space<vmem>>, vector<8x1xf32>,
    return
  }
  func.func @transform_0(%arg0: i32) -> (i32, i32) {
    %c0_i32 = arith.constant 0 : i32
    %c0_i32_0 = arith.constant 0 : i32
    return %arg0, %c0_i32 : i32, i32
  }
  func.func @transform_1(%arg0: i32) -> (i32, i32) {
    %c0_i32 = arith.constant 0 : i32
    %c0_i32_0 = arith.constant 0 : i32
    return %arg0, %c0_i32 : i32, i32
  }
  func.func @transform_2(%arg0: i32) -> (i32, i32) {
    %c0_i32 = arith.constant 0 : i32
    %c0_i32_0 = arith.constant 0 : i32
    %c0_i32_1 = arith.constant 0 : i32
    return %c0_i32, %c0_i32_0 : i32, i32
  }
  func.func @transform_3(%arg0: i32) -> (i32, i32) {
    %c0_i32 = arith.constant 0 : i32
    %c0_i32_0 = arith.constant 0 : i32
    %c0_i32_1 = arith.constant 0 : i32
    return %c0_i32, %c0_i32_0 : i32, i32
  }
  func.func @transform_4(%arg0: i32) -> (i32, i32) {
    %c0_i32 = arith.constant 0 : i32
    %c0_i32_0 = arith.constant 0 : i32
    %c0_i32_1 = arith.constant 0 : i32
    return %c0_i32, %c0_i32_0 : i32, i32
  }
  func.func @transform_5(%arg0: i32) -> (i32, i32) {
    %c0_i32 = arith.constant 0 : i32
    %c0_i32_0 = arith.constant 0 : i32
    %c0_i32_1 = arith.constant 0 : i32
    return %c0_i32, %c0_i32_0 : i32, i32
  }
  func.func @transform_6(%arg0: i32) -> (i32, i32) {
    %c0_i32 = arith.constant 0 : i32
    %c0_i32_0 = arith.constant 0 : i32
    return %arg0, %c0_i32 : i32, i32
  }
}

</mosaic_0001>

<llo_original>
// kernel: tpu_custom_call.1
$region0: #{tpu_custom_call.1}
  #allocation0 [shape = 'u32[]', space=smem, size = 0x4, offset = 0x4, fixed_abs, tag = 'smem constant byte address 0x4 - core index']
  #allocation1 [shape = 'u32[144,128]{1,0:T(1,128)}', space=vmem, size = 0x12000, scoped, tag = 'internal scratch']
  #allocation2 [shape = 'f32[1,1]{1,0:T(1,128)S(1)}', space=vmem, size = 0x200, scoped, tag = 'scoped memory for tpu_custom_call.1']
  %s0 = inlined_call_operand.hbm [shape: f32[8,32], index: 0, kind: input, shape index: {}]
  %s1 = inlined_call_operand.hbm [shape: f32[8,32], index: 1, kind: input, shape index: {}]
  %s2 = inlined_call_operand.hbm [shape: f32[32,32], index: 2, kind: input, shape index: {}]
  %s3 = inlined_call_operand.vmem [shape: f32[1,32], index: 3, kind: input, shape index: {}]
  %s4 = inlined_call_operand.vmem [shape: f32[1,32], index: 4, kind: input, shape index: {}]
  %s5 = inlined_call_operand.<no memory space> [shape: f32[1,1], index: 5, kind: input, shape index: {}]
  %s6 = inlined_call_operand.vmem [shape: f32[8,1], index: 6, kind: output, shape index: {}]
  %s7 = sld [smem:[#allocation0]]
  $region46: #{tpu_custom_call.1} parent=0
    _
  %s9 = ssub.s32 1, %s7
  %s10 = scalar_select 0, %s9, %s7
  %v11 = vstv %s5
  %12 = vst [vmem:[#allocation2] sm:$0x1] %v11
  $region1: #{tpu_custom_call.1} parent=0
    #allocation3 [shape = 'u8[4096]{0}', space=vmem, size = 0x1000, scoped, tag = 'input window, operand 0, single buffered']
    #allocation4 [shape = 's32[1]{0}', space=sflag, size = 0x4, scoped, tag = 'scoped memory for tpu_custom_call.1']
    #allocation5 [shape = 'u8[4096]{0}', space=vmem, size = 0x1000, scoped, tag = 'input window, operand 1, single buffered']
    #allocation6 [shape = 's32[1]{0}', space=sflag, size = 0x4, scoped, tag = 'scoped memory for tpu_custom_call.1']
    #allocation7 [shape = 'u8[16384]{0}', space=vmem, size = 0x4000, scoped, tag = 'input window, operand 2, single buffered']
    %13 = vsyncpa [#allocation4], 0
    %14 = vsyncpa [#allocation6], 0
    // Predicated region
    $region2: #{tpu_custom_call.1} parent=1 // pred_check
      _
    $region3: #{tpu_custom_call.1} parent=1 // pred_check_branch
      %16 = sbr.rel (0) target = $region5
    $region4: #{tpu_custom_call.1} parent=1 // pred_region
      %s18 = ssub.s32 128, 128
      %19 = vsyncadd [#allocation4], %s18
      %s21 = sshll.u32 [#allocation3], 4
      %s22 = int_to_ptr.vmem [resolvable:$true] %s21
      %24 = dma.hbm_to_vmem [thread:$0]  %s0, 128, %s22, [#allocation4]
    $region5: #{tpu_custom_call.1} parent=1 // pred_fallthru
      _
    // Predicated region
    $region6: #{tpu_custom_call.1} parent=1 // pred_check
      _
    $region7: #{tpu_custom_call.1} parent=1 // pred_check_branch
      %26 = sbr.rel (0) target = $region9
    $region8: #{tpu_custom_call.1} parent=1 // pred_region
      %s28 = ssub.s32 128, 128
      %29 = vsyncadd [#allocation6], %s28
      %s31 = sshll.u32 [#allocation5], 4
      %s32 = int_to_ptr.vmem [resolvable:$true] %s31
      %34 = dma.hbm_to_vmem [thread:$0]  %s1, 128, %s32, [#allocation6]
    $region9: #{tpu_custom_call.1} parent=1 // pred_fallthru
      _
    // Predicated region
    $region10: #{tpu_custom_call.1} parent=1 // pred_check
      _
    $region11: #{tpu_custom_call.1} parent=1 // pred_check_branch
      %36 = sbr.rel (0) target = $region13
    $region12: #{tpu_custom_call.1} parent=1 // pred_region
      %s38 = ssub.s32 512, 512
      %39 = vsyncadd [#allocation6], %s38
      %s40 = sshll.u32 [#allocation7], 4
      %s41 = int_to_ptr.vmem [resolvable:$true] %s40
      %46 = dma.hbm_to_vmem [thread:$0]  %s2, 512, %s41, [#allocation6], 128, 128, 8
    $region13: #{tpu_custom_call.1} parent=1 // pred_fallthru
      _
    // Predicated region
    $region14: #{tpu_custom_call.1} parent=1 // pred_check
      _
    $region15: #{tpu_custom_call.1} parent=1 // pred_check_branch
      %48 = sbr.rel (0) target = $region17
    $region16: #{tpu_custom_call.1} parent=1 // pred_region
      _
    $region17: #{tpu_custom_call.1} parent=1 // pred_fallthru
      _
    // Predicated region
    $region18: #{tpu_custom_call.1} parent=1 // pred_check
      _
    $region19: #{tpu_custom_call.1} parent=1 // pred_check_branch
      %50 = sbr.rel (0) target = $region21
    $region20: #{tpu_custom_call.1} parent=1 // pred_region
      _
    $region21: #{tpu_custom_call.1} parent=1 // pred_fallthru
      _
    // Predicated region
    $region22: #{tpu_custom_call.1} parent=1 // pred_check
      _
    $region23: #{tpu_custom_call.1} parent=1 // pred_check_branch
      %52 = sbr.rel (0) target = $region25
    $region24: #{tpu_custom_call.1} parent=1 // pred_region
      _
    $region25: #{tpu_custom_call.1} parent=1 // pred_fallthru
      _
    // Predicated region
    $region26: #{tpu_custom_call.1} parent=1 // pred_check
      _
    $region27: #{tpu_custom_call.1} parent=1 // pred_check_branch
      %54 = sbr.rel (0) target = $region29
    $region28: #{tpu_custom_call.1} parent=1 // pred_region
      %55 = dma.done [#allocation4], 128
    $region29: #{tpu_custom_call.1} parent=1 // pred_fallthru
      _
    // Predicated region
    $region30: #{tpu_custom_call.1} parent=1 // pred_check
      _
    $region31: #{tpu_custom_call.1} parent=1 // pred_check_branch
      %57 = sbr.rel (0) target = $region33
    $region32: #{tpu_custom_call.1} parent=1 // pred_region
      %58 = dma.done [#allocation6], 128
    $region33: #{tpu_custom_call.1} parent=1 // pred_fallthru
      _
    // Predicated region
    $region34: #{tpu_custom_call.1} parent=1 // pred_check
      _
    $region35: #{tpu_custom_call.1} parent=1 // pred_check_branch
      %60 = sbr.rel (0) target = $region37
    $region36: #{tpu_custom_call.1} parent=1 // pred_region
      %61 = dma.done [#allocation6], 512
    $region37: #{tpu_custom_call.1} parent=1 // pred_fallthru
      _
    %v62 = vld [vmem:[#allocation3] sm:$0xff]
    %v63 = vld [vmem:[#allocation5] sm:$0xff]
    %v64 = vmul.f32 %v62, %v63
    %v65 = vld [vmem:[#allocation7] sm:$0xff]
    %v66 = vld [vmem:[#allocation7 + $0x8] sm:$0xff]
    %v67 = vld [vmem:[#allocation7 + $0x10] sm:$0xff]
    %v68 = vld [vmem:[#allocation7 + $0x18] sm:$0xff]
    %v69 = vld [vmem:[%s3] sm:$0x1]
    %v71 = vlaneseq
    %v72 = vshrl.u32 %v71, 7
    %v73 = vsub.s32 0, %v72
    %v74 = vrot.slane %v69, %v73
    %vm76 = vcmask 261120
    %v78 = vsel %vm76, %v64, 0
    %80 = vmatprep.subr.mxu0 0.0
    %81 = vmatpush1.msra.mxu0 0.0
    %82 = vmatprep.subr.mxu0 0.0
    %83 = vmatpush1.msra.mxu0 0.0
    %84 = vmatprep.subr.mxu0 0.0
    %85 = vmatpush1.msra.mxu0 0.0
    %86 = vmatprep.subr.mxu0 0.0
    %87 = vmatpush1.msra.mxu0 0.0
    %88 = vmatprep.subr.mxu0 0.0
    %89 = vmatpush1.msra.mxu0 0.0
    %90 = vmatprep.subr.mxu0 0.0
    %91 = vmatpush1.msra.mxu0 0.0
    %92 = vmatprep.subr.mxu0 0.0
    %93 = vmatpush1.msra.mxu0 0.0
    %94 = vmatprep.subr.mxu0 0.0
    %95 = vmatpush1.msra.mxu0 0.0
    %96 = vmatprep.subr.mxu0 0.0
    %97 = vmatpush1.msra.mxu0 0.0
    %98 = vmatprep.subr.mxu0 0.0
    %99 = vmatpush1.msra.mxu0 0.0
    %100 = vmatprep.subr.mxu0 0.0
    %101 = vmatpush1.msra.mxu0 0.0
    %102 = vmatprep.subr.mxu0 0.0
    %103 = vmatpush1.msra.mxu0 0.0
    %104 = vmatprep.subr.mxu0 0.0
    %105 = vmatpush1.msra.mxu0 %v68
    %106 = vmatprep.subr.mxu0 0.0
    %107 = vmatpush1.msra.mxu0 %v67
    %108 = vmatprep.subr.mxu0 0.0
    %109 = vmatpush1.msra.mxu0 %v66
    %110 = vmatprep.subr.mxu0 0.0
    %111 = vmatpush1.msra.mxu0 %v65
    %112 = vmatprep.subr.mxu0 0.0
    %113 = vmatpush2.msra.mxu0 0.0
    %114 = vmatprep.subr.mxu0 0.0
    %115 = vmatpush2.msra.mxu0 0.0
    %116 = vmatprep.subr.mxu0 0.0
    %117 = vmatpush2.msra.mxu0 0.0
    %118 = vmatprep.subr.mxu0 0.0
    %119 = vmatpush2.msra.mxu0 0.0
    %120 = vmatprep.subr.mxu0 0.0
    %121 = vmatpush2.msra.mxu0 0.0
    %122 = vmatprep.subr.mxu0 0.0
    %123 = vmatpush2.msra.mxu0 0.0
    %124 = vmatprep.subr.mxu0 0.0
    %125 = vmatpush2.msra.mxu0 0.0
    %126 = vmatprep.subr.mxu0 0.0
    %127 = vmatpush2.msra.mxu0 0.0
    %128 = vmatprep.subr.mxu0 0.0
    %129 = vmatpush2.msra.mxu0 0.0
    %130 = vmatprep.subr.mxu0 0.0
    %131 = vmatpush2.msra.mxu0 0.0
    %132 = vmatprep.subr.mxu0 0.0
    %133 = vmatpush2.msra.mxu0 0.0
    %134 = vmatprep.subr.mxu0 0.0
    %135 = vmatpush2.msra.mxu0 0.0
    %136 = vmatprep.subr.mxu0 0.0
    %137 = vmatpush2.msra.mxu0 0.0
    %138 = vmatprep.subr.mxu0 0.0
    %139 = vmatpush2.msra.mxu0 0.0
    %140 = vmatprep.subr.mxu0 0.0
    %141 = vmatpush2.msra.mxu0 0.0
    %142 = vmatprep.subr.mxu0 0.0
    %143 = vmatpush2.msra.mxu0 0.0
    %144 = vmatprep.mubr.f32.mxu0 0.0
    %145 = vmatmul.mubr.f32.gmra.mxu0 %v78
    %v146 = vpop.f32.mrf.mxu0
    %v147 = vadd.f32 %v74, %v146
    %v148 = vpop.f32.mrf.mxu0
    %149 = vdwg.mxu0
    %v150 = vmax.f32 %v147, 0.0
    %v151 = vld [vmem:[%s4] sm:$0x1]
    %v153 = vlaneseq
    %v154 = vshrl.u32 %v153, 7
    %v155 = vsub.s32 0, %v154
    %v156 = vrot.slane %v151, %v155
    %v158 = vmul.f32 %v150, %v156
    %v159 = vsel %vm76, %v158, 0.0
    %160 = vadd.xlane.f32.xlu0 %v159
    %v161 = vpop.xlane.xlu0 %160
    %v162 = vld [vmem:[#allocation2] sm:$0x1]
    %v164 = vlaneseq
    %v165 = vshrl.u32 %v164, 7
    %v166 = vsub.s32 0, %v165
    %v167 = vrot.slane %v162, %v166
    %v169 = vadd.f32 %v161, %v167
    %vm170 = vcmask 7168
    %171 = vst.msk [vmem:[%s6] sm:$0xff] %vm170, %v169
    // Predicated region
    $region38: #{tpu_custom_call.1} parent=1 // pred_check
      _
    $region39: #{tpu_custom_call.1} parent=1 // pred_check_branch
      %173 = sbr.rel (0) target = $region41
    $region40: #{tpu_custom_call.1} parent=1 // pred_region
      _
    $region41: #{tpu_custom_call.1} parent=1 // pred_fallthru
      _
    // Predicated region
    $region42: #{tpu_custom_call.1} parent=1 // pred_check
      _
    $region43: #{tpu_custom_call.1} parent=1 // pred_check_branch
      %175 = sbr.rel (0) target = $region45
    $region44: #{tpu_custom_call.1} parent=1 // pred_region
      _
    $region45: #{tpu_custom_call.1} parent=1 // pred_fallthru
      _
    %176 = vsyncpa [#allocation4], 1
    %177 = vsyncpa [#allocation6], 1

</llo_original>
